<compile_context>
chip_gen: v7x
topology: tpu7x:2x2x1
jax: 0.10.0
libtpu: 0.0.40
codegen_flags: <defaults>
</compile_context>

<pallas_src>
import jax
import jax.numpy as jnp
from jax.experimental import pallas as pl
from jax.experimental.pallas import tpu as pltpu


def _scaling_kernel(x_ref, const_ref, o_ref):
    # x_ref / o_ref : (row_block, lane_block) tile of the flattened (N*C, H*W) view.
    # const_ref     : (row_block, 2) per-row constants; col 0 = 1/scale, col 1 = -shift/scale.
    c = const_ref[...]
    inv = c[:, 0:1]    # (row_block, 1), lane-broadcast below
    bias = c[:, 1:2]   # (row_block, 1)
    o_ref[...] = x_ref[...] * inv + bias


def _round_up(x, m):
    return ((x + m - 1) // m) * m


def _tile_bytes():
    # v5e: keep ~2 MiB tiles (16 MiB scoped-VMEM default, ~820 GB/s HBM already
    # saturated).  v6e/v7x: ~4 MiB tiles amortize the fixed ~0.35 us per-step
    # overhead better on their faster HBM; double-buffered in+out is ~16 MiB,
    # well inside the explicit 32 MiB vmem_limit below (v7x physical = 64 MiB).
    try:
        kind = jax.devices()[0].device_kind.lower()
    except Exception:
        kind = ""
    if "v5" in kind:
        return 2 * 1024 * 1024
    return 4 * 1024 * 1024


def scaling_layer(x, shift, scale, *, donate_input=False):
    """x: (N, C, H, W); shift, scale: (C,).  Returns (x - shift) / scale."""
    n, c, h, w = x.shape
    assert shift.shape == (c,) and scale.shape == (c,)

    r = n * c          # rows of the flattened view
    l = h * w          # lanes of the flattened view
    x2 = x.reshape(r, l)

    # Fold the affine into a single FMA: out = x * inv + bias (computed in f32,
    # cast to the compute dtype once).
    inv = 1.0 / scale.astype(jnp.float32)
    bias = -shift.astype(jnp.float32) * inv
    const = jnp.stack([inv, bias], axis=-1)                 # (C, 2)
    const_rows = jnp.tile(const, (n, 1)).astype(x.dtype)    # (N*C, 2), row i = (n*C + c)

    # Capped cdiv tiling: blocks never exceed the VMEM budget, edge blocks are
    # masked by Pallas, lane blocks are 128-multiples, row blocks match the
    # dtype's sublane packing.
    itemsize = jnp.dtype(x.dtype).itemsize
    row_unit = max(8, (8 * 4) // itemsize)          # 8 f32 / 16 bf16 / 32 int8-fp8
    budget_elems = max(_tile_bytes() // itemsize, row_unit * 128)

    lane_cap = max(128, ((budget_elems // row_unit) // 128) * 128)
    lane_block = min(_round_up(l, 128), lane_cap)
    row_cap = max(row_unit, ((budget_elems // lane_block) // row_unit) * row_unit)
    row_block = min(_round_up(r, row_unit), row_cap)

    grid = (pl.cdiv(r, row_block), pl.cdiv(l, lane_block))

    out2 = pl.pallas_call(
        _scaling_kernel,
        out_shape=jax.ShapeDtypeStruct((r, l), x.dtype),
        grid=grid,
        in_specs=[
            pl.BlockSpec((row_block, lane_block), lambda i, j: (i, j)),
            # Constant block index does not change over the fast j axis -> no re-DMA.
            pl.BlockSpec((row_block, 2), lambda i, j: (i, 0)),
        ],
        out_specs=pl.BlockSpec((row_block, lane_block), lambda i, j: (i, j)),
        compiler_params=pltpu.CompilerParams(
            dimension_semantics=("parallel", "parallel"),
            vmem_limit_bytes=32 * 1024 * 1024,
        ),
        input_output_aliases=({0: 0} if donate_input else {}),
    )(x2, const_rows)

    return out2.reshape(n, c, h, w)


if __name__ == "__main__":
    # Deterministic buffers (mirrors ScalingLayer.__init__ register_buffer values).
    shift = jnp.array([-0.030, -0.088, -0.188], dtype=jnp.float32)
    scale = jnp.array([0.458, 0.448, 0.450], dtype=jnp.float32)

    # Small input consistent with the module: NCHW image batch with 3 channels.
    key = jax.random.PRNGKey(0)
    x = jax.random.normal(key, (2, 3, 16, 16), dtype=jnp.float32)

    out = scaling_layer(x, shift, scale)
    out = jax.block_until_ready(out)

    # Reference check (plain JAX, same broadcasting as PyTorch).
    ref = (x - shift[None, :, None, None]) / scale[None, :, None, None]
    assert out.shape == x.shape
    assert jnp.allclose(out, ref, rtol=1e-5, atol=1e-6)

    print("KERNEL_OK")
</pallas_src>

<mosaic_0001>
module attributes {stable_mosaic.version = 11 : i64} {
  func.func @_scaling_kernel(%arg0: i32, %arg1: i32, %arg2: memref<8x256xf32, #tpu.memory_space<vmem>>, %arg3: memref<8x2xf32, #tpu.memory_space<vmem>>, %arg4: memref<8x256xf32, #tpu.memory_space<vmem>>) attributes {dimension_semantics = [#tpu.dimension_semantics<parallel>, #tpu.dimension_semantics<parallel>], iteration_bounds = array<i64: 1, 1>, scalar_prefetch = 0 : i64, scratch_operands = 0 : i64, tpu.core_type = #tpu.core_type<tc>, window_params = [{transform_indices = @transform_0, window_bounds = array<i64: 8, 256>}, {transform_indices = @transform_1, window_bounds = array<i64: 8, 2>}, {transform_indices = @transform_2, window_bounds = array<i64: 8, 256>}]} {
    %c0 = arith.constant 0 : index
    %c0_0 = arith.constant 0 : index
    %0 = vector.load %arg3[%c0, %c0_0] : memref<8x2xf32, #tpu.memory_space<vmem>>, vector<8x2xf32>
    %1 = vector.extract_strided_slice %0 {offsets = [0, 0], sizes = [8, 1], strides = [1, 1]} : vector<8x2xf32> to vector<8x1xf32>
    %2 = vector.extract_strided_slice %0 {offsets = [0, 1], sizes = [8, 1], strides = [1, 1]} : vector<8x2xf32> to vector<8x1xf32>
    %c0_1 = arith.constant 0 : index
    %c0_2 = arith.constant 0 : index
    %3 = vector.load %arg2[%c0_1, %c0_2] : memref<8x256xf32, #tpu.memory_space<vmem>>, vector<8x256xf32>
    %4 = vector.broadcast %1 : vector<8x1xf32> to vector<8x256xf32>
    %5 = arith.mulf %3, %4 : vector<8x256xf32>
    %6 = vector.broadcast %2 : vector<8x1xf32> to vector<8x256xf32>
    %7 = arith.addf %5, %6 : vector<8x256xf32>
    %c0_3 = arith.constant 0 : index
    %c0_4 = arith.constant 0 : index
    %8 = vector.load %arg4[%c0_3, %c0_4] : memref<8x256xf32, #tpu.memory_space<vmem>>, vector<8x256xf32>
    tpu.vector_store %arg4[%c0_3, %c0_4], %7 {strides = array<i32>} : memref<8x256xf32, #tpu.memory_space<vmem>>, vector<8x256xf32>,
    return
  }
  func.func @transform_0(%arg0: i32, %arg1: i32) -> (i32, i32) {
    %c0_i32 = arith.constant 0 : i32
    return %arg0, %arg1 : i32, i32
  }
  func.func @transform_1(%arg0: i32, %arg1: i32) -> (i32, i32) {
    %c0_i32 = arith.constant 0 : i32
    %c0_i32_0 = arith.constant 0 : i32
    return %arg0, %c0_i32 : i32, i32
  }
  func.func @transform_2(%arg0: i32, %arg1: i32) -> (i32, i32) {
    %c0_i32 = arith.constant 0 : i32
    return %arg0, %arg1 : i32, i32
  }
}

</mosaic_0001>

<llo_original>
// kernel: tpu_custom_call.1
$region0: #{tpu_custom_call.1}
  #allocation0 [shape = 'u32[]', space=smem, size = 0x4, offset = 0x4, fixed_abs, tag = 'smem constant byte address 0x4 - core index']
  #allocation1 [shape = 'u32[144,128]{1,0:T(1,128)}', space=vmem, size = 0x12000, scoped, tag = 'internal scratch']
  %s0 = inlined_call_operand.hbm [shape: f32[6,256], index: 0, kind: input, shape index: {}]
  %s1 = inlined_call_operand.vmem [shape: f32[6,2], index: 1, kind: input, shape index: {}]
  %s2 = inlined_call_operand.hbm [shape: f32[6,256], index: 2, kind: output, shape index: {}]
  %s3 = sld [smem:[#allocation0]]
  $region22: #{tpu_custom_call.1} parent=0
    _
  %s5 = ssub.s32 1, %s3
  %s6 = scalar_select 0, %s5, %s3
  $region1: #{tpu_custom_call.1} parent=0
    #allocation2 [shape = 'u8[8192]{0}', space=vmem, size = 0x2000, scoped, tag = 'input window, operand 0, single buffered']
    #allocation3 [shape = 's32[1]{0}', space=sflag, size = 0x4, scoped, tag = 'scoped memory for tpu_custom_call.1']
    #allocation4 [shape = 's32[1]{0}', space=sflag, size = 0x4, scoped, tag = 'scoped memory for tpu_custom_call.1']
    #allocation5 [shape = 'u8[8192]{0}', space=vmem, size = 0x2000, scoped, tag = 'output window, operand 0, single buffered']
    %7 = vsyncpa [#allocation3], 0
    %8 = vsyncpa [#allocation4], 0
    // Predicated region
    $region2: #{tpu_custom_call.1} parent=1 // pred_check
      _
    $region3: #{tpu_custom_call.1} parent=1 // pred_check_branch
      %10 = sbr.rel (0) target = $region5
    $region4: #{tpu_custom_call.1} parent=1 // pred_region
      %s12 = ssub.s32 256, 256
      %13 = vsyncadd [#allocation3], %s12
      %s15 = sshll.u32 [#allocation2], 4
      %s16 = int_to_ptr.vmem [resolvable:$true] %s15
      %18 = dma.hbm_to_vmem [thread:$0]  %s0, 256, %s16, [#allocation3]
    $region5: #{tpu_custom_call.1} parent=1 // pred_fallthru
      _
    // Predicated region
    $region6: #{tpu_custom_call.1} parent=1 // pred_check
      _
    $region7: #{tpu_custom_call.1} parent=1 // pred_check_branch
      %20 = sbr.rel (0) target = $region9
    $region8: #{tpu_custom_call.1} parent=1 // pred_region
      _
    $region9: #{tpu_custom_call.1} parent=1 // pred_fallthru
      _
    // Predicated region
    $region10: #{tpu_custom_call.1} parent=1 // pred_check
      _
    $region11: #{tpu_custom_call.1} parent=1 // pred_check_branch
      %22 = sbr.rel (0) target = $region13
    $region12: #{tpu_custom_call.1} parent=1 // pred_region
      %23 = dma.done [#allocation3], 256
    $region13: #{tpu_custom_call.1} parent=1 // pred_fallthru
      _
    %v24 = vld [vmem:[%s1] sm:$0xff]
    %v25 = vld [vmem:[#allocation2] sm:$0xff]
    %v26 = vld [vmem:[#allocation2 + $0x8] sm:$0xff]
    %28 = vset.pattern.permute.xlu0 0
    %29 = vperm.xlu0 %28, %v24
    %v30 = vpop.permute.xlu0 %29
    %v32 = vmul.f32 %v25, %v30
    %v33 = vmul.f32 %v26, %v30
    %34 = vset.pattern.permute.xlu0 1
    %35 = vperm.xlu0 %34, %v24
    %v36 = vpop.permute.xlu0 %35
    %v38 = vadd.f32 %v32, %v36
    %v39 = vadd.f32 %v33, %v36
    %40 = vst [vmem:[#allocation5] sm:$0xff] %v38
    %41 = vst [vmem:[#allocation5 + $0x8] sm:$0xff] %v39
    // Predicated region
    $region14: #{tpu_custom_call.1} parent=1 // pred_check
      _
    $region15: #{tpu_custom_call.1} parent=1 // pred_check_branch
      %43 = sbr.rel (0) target = $region17
    $region16: #{tpu_custom_call.1} parent=1 // pred_region
      %s45 = ssub.s32 256, 256
      %46 = vsyncadd [#allocation4], %s45
      %s48 = sshll.u32 [#allocation5], 4
      %s49 = int_to_ptr.vmem [resolvable:$true] %s48
      %51 = dma.vmem_to_hbm [thread:$0]  %s49, 256, %s2, [#allocation4]
    $region17: #{tpu_custom_call.1} parent=1 // pred_fallthru
      _
    // Predicated region
    $region18: #{tpu_custom_call.1} parent=1 // pred_check
      _
    $region19: #{tpu_custom_call.1} parent=1 // pred_check_branch
      %53 = sbr.rel (0) target = $region21
    $region20: #{tpu_custom_call.1} parent=1 // pred_region
      %54 = dma.done [#allocation4], 256
    $region21: #{tpu_custom_call.1} parent=1 // pred_fallthru
      _
    %55 = vsyncpa [#allocation3], 1
    %56 = vsyncpa [#allocation4], 1

</llo_original>
